<compile_context>
chip_gen: v6e
topology: v6e:2x2x1
jax: 0.10.0
libtpu: 0.0.40
codegen_flags: <defaults>
</compile_context>

<pallas_src>
import math

import jax
import jax.numpy as jnp
from jax.experimental import pallas as pl
from jax.experimental.pallas import tpu as pltpu


def _make_kernel(tb: int, seq: int, d: int):
    rows = tb * seq

    def kernel(v_ref, mask_ref, wf_ref, bf_ref, ww_ref, bw_ref, out_ref, attw_ref):
        v = v_ref[...]                                     # (TB, S, D) f32
        x = v.reshape(rows, d).astype(wf_ref.dtype)        # (TB*S, D) matmul operand

        # Fused att|gate projection: one MXU pass, f32 accumulation.
        hu = (jnp.dot(x, wf_ref[...], preferred_element_type=jnp.float32)
              + bf_ref[...])                               # (TB*S, 2D) f32
        h = jnp.tanh(hu[:, :d])
        u = jax.nn.sigmoid(hu[:, d:])
        z = (h * u).reshape(tb, seq, d)                    # (TB, S, D) f32

        # D -> 1 projection kept off the MXU: VPU multiply + lane reduce.
        # ww_ref / bw_ref are already pre-scaled by 1/temperature.
        logits = jnp.sum(z * ww_ref[...], axis=-1) + bw_ref[0]      # (TB, S)

        # MaskedLinear semantics: mask == 1.0 -> padded -> -inf, softmax over SEQ.
        # NB: a fully padded bag yields NaN weights (0/0), matching the reference.
        logits = jnp.where(mask_ref[...] > 0.5, -jnp.inf, logits)
        m = jnp.max(logits, axis=-1, keepdims=True)
        e = jnp.exp(logits - m)
        weights = e / jnp.sum(e, axis=-1, keepdims=True)             # (TB, S) f32

        attw_ref[...] = weights                                      # lane-dense store

        # scaled_attention[b] = sum_s weights[b, s] * v[b, s, :]
        if seq >= 128:
            # big bags: contraction over S on the MXU
            out_ref[...] = jnp.einsum("bs,bsd->bd", weights, v,
                                      preferred_element_type=jnp.float32)
        else:
            # tiny bags: broadcast-mul + sublane reduce (not worth an MXU drain)
            out_ref[...] = jnp.sum(weights[..., None] * v, axis=1)

    return kernel


def _pick_tb(B, S, D, target_rows=256, block_bytes=8 << 20):
    """Largest batch-tile that fills the vregs/MXU rows while fitting VMEM."""
    budget_rows = max(1, block_bytes // (4 * D))
    divs = [t for t in range(1, B + 1) if B % t == 0 and t * S <= budget_rows]
    if not divs:
        return 1
    for t in divs:                      # fill rows AND keep >=2 grid steps (v7x)
        if t * S >= target_rows and B // t >= 2:
            return t
    for t in divs:
        if t * S >= target_rows:
            return t
    return divs[-1]


def _vmem_limit_bytes(tb, S, D, w_itemsize):
    blk = tb * S * D * 4 + tb * S * 4 + tb * D * 4 + tb * S * 4   # v, mask, out, attw
    wts = D * (2 * D) * w_itemsize + (2 * D) * 4 + D * 4          # fused W, fused b, ww
    est = 2 * (blk + wts)                                          # double-buffered
    return int(min(max(2 * est + (8 << 20), 16 << 20), 56 << 20))


def _pack_params(params, temperature, matmul_dtype):
    """Fuse Wa|Wg, ba|bg; fold 1/temperature into the logit weight/bias."""
    wa, ba, wg, bg, ww, bw = params
    d = wa.shape[0]
    w_fused = jnp.concatenate([wa, wg], axis=1).astype(matmul_dtype)   # (D, 2D)
    b_fused = jnp.concatenate([ba, bg], axis=1).astype(jnp.float32)    # (1, 2D)
    inv_t = jnp.float32(1.0 / temperature)
    ww_row = (ww.reshape(1, d) * inv_t).astype(jnp.float32)            # (1, D)
    bw_s = (bw.reshape(1) * inv_t).astype(jnp.float32)                 # (1,) -> SMEM
    return w_fused, b_fused, ww_row, bw_s


def gated_attention(v, mask, params, temperature=1.0, *, tb=None,
                    matmul_dtype=jnp.bfloat16):
    """v: (B, S, D) f32; mask: (B, S, 1) bool/float (truthy = padded) or None.
    Returns (scaled_attention (B, D), attention_weights (B, S, 1))."""
    assert temperature > 0, "temperature must be > 0"
    B, S, D = v.shape
    v = v.astype(jnp.float32)
    if mask is None:
        mask2 = jnp.zeros((B, S), jnp.float32)
    else:
        mask2 = mask.reshape(B, S).astype(jnp.float32)     # lane-dense mask

    w_fused, b_fused, ww_row, bw_s = _pack_params(params, temperature, matmul_dtype)

    if tb is None:
        tb = _pick_tb(B, S, D)
    assert B % tb == 0, "tb must divide the batch size"

    full2d = lambda b: (0, 0)
    grid_spec = pltpu.PrefetchScalarGridSpec(
        num_scalar_prefetch=0,
        grid=(B // tb,),
        in_specs=[
            pl.BlockSpec((tb, S, D), lambda b: (b, 0, 0)),          # v
            pl.BlockSpec((tb, S), lambda b: (b, 0)),                # mask (lane-dense)
            pl.BlockSpec((D, 2 * D), full2d),                       # fused Wa|Wg
            pl.BlockSpec((1, 2 * D), full2d),                       # fused ba|bg
            pl.BlockSpec((1, D), full2d),                           # ww row (pre-scaled)
            pl.BlockSpec(memory_space=pltpu.MemorySpace.SMEM),      # bw scalar (pre-scaled)
        ],
        out_specs=[
            pl.BlockSpec((tb, D), lambda b: (b, 0)),                # scaled attention
            pl.BlockSpec((tb, S), lambda b: (b, 0)),                # attention weights
        ],
    )
    out_shapes = (
        jax.ShapeDtypeStruct((B, D), jnp.float32),
        jax.ShapeDtypeStruct((B, S), jnp.float32),
    )

    scaled, attw = pl.pallas_call(
        _make_kernel(tb, S, D),
        out_shape=out_shapes,
        grid_spec=grid_spec,
        compiler_params=pltpu.CompilerParams(
            dimension_semantics=("parallel",),
            vmem_limit_bytes=_vmem_limit_bytes(
                tb, S, D, jnp.dtype(matmul_dtype).itemsize),
        ),
    )(v, mask2, w_fused, b_fused, ww_row, bw_s)

    # match the torch API: (B, D), (B, S, 1)
    return scaled, attw[..., None]


def init_params(key, d_model):
    """Deterministic init mimicking torch.nn.Linear's U(-1/sqrt(fan_in), 1/sqrt(fan_in))."""
    ks = jax.random.split(key, 6)
    bound = 1.0 / math.sqrt(d_model)
    wa = jax.random.uniform(ks[0], (d_model, d_model), jnp.float32, -bound, bound)
    ba = jax.random.uniform(ks[1], (1, d_model), jnp.float32, -bound, bound)
    wg = jax.random.uniform(ks[2], (d_model, d_model), jnp.float32, -bound, bound)
    bg = jax.random.uniform(ks[3], (1, d_model), jnp.float32, -bound, bound)
    ww = jax.random.uniform(ks[4], (d_model, 1), jnp.float32, -bound, bound)
    bw = jax.random.uniform(ks[5], (1, 1), jnp.float32, -bound, bound)
    return wa, ba, wg, bg, ww, bw


def reference(v, mask, params, temperature=1.0, matmul_dtype=jnp.float32):
    """Pure-JAX reference of the PyTorch forward (matmul_dtype for the two
    d_model x d_model projections; everything else in f32)."""
    wa, ba, wg, bg, ww, bw = params
    vm = v.astype(matmul_dtype)
    h = jnp.tanh(jnp.dot(vm, wa.astype(matmul_dtype),
                         preferred_element_type=jnp.float32) + ba)
    u = jax.nn.sigmoid(jnp.dot(vm, wg.astype(matmul_dtype),
                               preferred_element_type=jnp.float32) + bg)
    z = h * u
    logits = jnp.sum(z * ww.reshape(1, 1, -1), axis=-1, keepdims=True) + bw  # == z @ ww + bw
    logits = jnp.where(mask > 0.5, -jnp.inf, logits) / temperature
    weights = jax.nn.softmax(logits, axis=1)
    scaled = jnp.sum(weights * v, axis=1)                                    # == (w^T @ v)
    return scaled, weights


if __name__ == "__main__":
    key = jax.random.PRNGKey(0)
    k_v, k_p = jax.random.split(key)

    B, SEQ, D = 4, 8, 32
    temperature = 1.0

    v = jax.random.normal(k_v, (B, SEQ, D), jnp.float32)
    # mask: some trailing positions padded (True -> 1.0)
    mask = jnp.zeros((B, SEQ, 1), jnp.float32)
    mask = mask.at[1, -2:, 0].set(1.0)
    mask = mask.at[3, -5:, 0].set(1.0)

    params = init_params(k_p, D)

    # 1) exact-precision path (f32 MXU operands) vs the pure-JAX f32 reference
    s32, a32 = gated_attention(v, mask, params, temperature,
                               matmul_dtype=jnp.float32)
    jax.block_until_ready((s32, a32))
    rs, ra = reference(v, mask, params, temperature, matmul_dtype=jnp.float32)
    assert jnp.allclose(s32, rs, atol=1e-5, rtol=1e-4)
    assert jnp.allclose(a32, ra.reshape(B, SEQ, 1), atol=1e-5, rtol=1e-4)

    # 2) default fast path (bf16 MXU operands, f32 accumulation / elementwise)
    sbf, abf = gated_attention(v, mask, params, temperature)
    jax.block_until_ready((sbf, abf))
    rsb, rab = reference(v, mask, params, temperature, matmul_dtype=jnp.bfloat16)
    assert jnp.allclose(sbf, rsb, atol=1e-4, rtol=1e-3)
    assert jnp.allclose(abf, rab.reshape(B, SEQ, 1), atol=1e-4, rtol=1e-3)
    assert sbf.shape == (B, D) and abf.shape == (B, SEQ, 1)

    # 3) multi-step grid (tb < B) exercises the pipelined / megacore path
    s2, a2 = gated_attention(v, mask, params, temperature, tb=2,
                             matmul_dtype=jnp.float32)
    jax.block_until_ready((s2, a2))
    assert jnp.allclose(s2, rs, atol=1e-5, rtol=1e-4)
    assert jnp.allclose(a2, ra.reshape(B, SEQ, 1), atol=1e-5, rtol=1e-4)

    print("KERNEL_OK")
</pallas_src>

<mosaic_0001>
module attributes {stable_mosaic.version = 11 : i64} {
  func.func @kernel(%arg0: i32, %arg1: memref<4x8x32xf32, #tpu.memory_space<vmem>>, %arg2: memref<4x8xf32, #tpu.memory_space<vmem>>, %arg3: memref<32x64xf32, #tpu.memory_space<vmem>>, %arg4: memref<1x64xf32, #tpu.memory_space<vmem>>, %arg5: memref<1x32xf32, #tpu.memory_space<vmem>>, %arg6: memref<1xf32, #tpu.memory_space<smem>>, %arg7: memref<4x32xf32, #tpu.memory_space<vmem>>, %arg8: memref<4x8xf32, #tpu.memory_space<vmem>>) attributes {dimension_semantics = [#tpu.dimension_semantics<parallel>], iteration_bounds = array<i64: 1>, scalar_prefetch = 0 : i64, scratch_operands = 0 : i64, tpu.core_type = #tpu.core_type<tc>, window_params = [{transform_indices = @transform_0, window_bounds = array<i64: 4, 8, 32>}, {transform_indices = @transform_1, window_bounds = array<i64: 4, 8>}, {pipeline_mode = #tpu.pipeline_mode<synchronous>, transform_indices = @transform_2, window_bounds = array<i64: 32, 64>}, {pipeline_mode = #tpu.pipeline_mode<synchronous>, transform_indices = @transform_3, window_bounds = array<i64: 1, 64>}, {pipeline_mode = #tpu.pipeline_mode<synchronous>, transform_indices = @transform_4, window_bounds = array<i64: 1, 32>}, {transform_indices = @transform_5, window_bounds = array<i64: 1>}, {transform_indices = @transform_6, window_bounds = array<i64: 4, 32>}, {transform_indices = @transform_7, window_bounds = array<i64: 4, 8>}]} {
    %c0 = arith.constant 0 : index
    %c0_0 = arith.constant 0 : index
    %c0_1 = arith.constant 0 : index
    %0 = vector.load %arg1[%c0, %c0_0, %c0_1] : memref<4x8x32xf32, #tpu.memory_space<vmem>>, vector<4x8x32xf32>
    %1 = vector.shape_cast %0 : vector<4x8x32xf32> to vector<32x32xf32>
    %c0_2 = arith.constant 0 : index
    %c0_3 = arith.constant 0 : index
    %2 = vector.load %arg3[%c0_2, %c0_3] : memref<32x64xf32, #tpu.memory_space<vmem>>, vector<32x64xf32>
    %cst = arith.constant dense<0.000000e+00> : vector<32x64xf32>
    %3 = tpu.matmul %1, %2, %cst {dimension_numbers = #tpu.dot_dimension_numbers<[1], [0], [0], [1], [0, 0, 1, 1], [], []>} : vector<32x32xf32>, vector<32x64xf32>, vector<32x64xf32> -> vector<32x64xf32>
    %c0_4 = arith.constant 0 : index
    %c0_5 = arith.constant 0 : index
    %4 = vector.load %arg4[%c0_4, %c0_5] : memref<1x64xf32, #tpu.memory_space<vmem>>, vector<1x64xf32>
    %5 = vector.broadcast %4 : vector<1x64xf32> to vector<32x64xf32>
    %6 = arith.addf %3, %5 : vector<32x64xf32>
    %7 = vector.extract_strided_slice %6 {offsets = [0, 0], sizes = [32, 32], strides = [1, 1]} : vector<32x64xf32> to vector<32x32xf32>
    %8 = math.tanh %7 : vector<32x32xf32>
    %9 = vector.extract_strided_slice %6 {offsets = [0, 32], sizes = [32, 32], strides = [1, 1]} : vector<32x64xf32> to vector<32x32xf32>
    %10 = arith.negf %9 : vector<32x32xf32>
    %11 = math.exp %10 : vector<32x32xf32>
    %cst_6 = arith.constant 1.000000e+00 : f32
    %12 = vector.broadcast %cst_6 : f32 to vector<32x32xf32>
    %13 = arith.addf %12, %11 : vector<32x32xf32>
    %14 = arith.divf %12, %13 : vector<32x32xf32>
    %15 = arith.mulf %8, %14 : vector<32x32xf32>
    %16 = vector.shape_cast %15 : vector<32x32xf32> to vector<4x8x32xf32>
    %c0_7 = arith.constant 0 : index
    %c0_8 = arith.constant 0 : index
    %17 = vector.load %arg5[%c0_7, %c0_8] : memref<1x32xf32, #tpu.memory_space<vmem>>, vector<1x32xf32>
    %18 = vector.shape_cast %17 : vector<1x32xf32> to vector<1x1x32xf32>
    %19 = vector.broadcast %18 : vector<1x1x32xf32> to vector<4x8x32xf32>
    %20 = arith.mulf %16, %19 : vector<4x8x32xf32>
    %cst_9 = arith.constant dense<0.000000e+00> : vector<4x8xf32>
    %21 = vector.multi_reduction <add>, %20, %cst_9 [2] : vector<4x8x32xf32> to vector<4x8xf32>
    %c0_10 = arith.constant 0 : index
    %22 = memref.load %arg6[%c0_10] : memref<1xf32, #tpu.memory_space<smem>>
    %23 = vector.broadcast %22 : f32 to vector<4x8xf32>
    %24 = arith.addf %21, %23 : vector<4x8xf32>
    %c0_11 = arith.constant 0 : index
    %c0_12 = arith.constant 0 : index
    %25 = vector.load %arg2[%c0_11, %c0_12] : memref<4x8xf32, #tpu.memory_space<vmem>>, vector<4x8xf32>
    %cst_13 = arith.constant 5.000000e-01 : f32
    %26 = vector.broadcast %cst_13 : f32 to vector<4x8xf32>
    %27 = arith.cmpf ogt, %25, %26 : vector<4x8xf32>
    %cst_14 = arith.constant 0xFF800000 : f32
    %28 = vector.broadcast %cst_14 : f32 to vector<4x8xf32>
    %29 = arith.select %27, %28, %24 : vector<4x8xi1>, vector<4x8xf32>
    %cst_15 = arith.constant dense<0xFF800000> : vector<4xf32>
    %30 = vector.multi_reduction <maximumf>, %29, %cst_15 [1] : vector<4x8xf32> to vector<4xf32>
    %31 = vector.shape_cast %30 : vector<4xf32> to vector<4x1xf32>
    %32 = vector.broadcast %31 : vector<4x1xf32> to vector<4x8xf32>
    %33 = arith.subf %29, %32 : vector<4x8xf32>
    %34 = math.exp %33 : vector<4x8xf32>
    %cst_16 = arith.constant dense<0.000000e+00> : vector<4xf32>
    %35 = vector.multi_reduction <add>, %34, %cst_16 [1] : vector<4x8xf32> to vector<4xf32>
    %36 = vector.shape_cast %35 : vector<4xf32> to vector<4x1xf32>
    %37 = vector.broadcast %36 : vector<4x1xf32> to vector<4x8xf32>
    %38 = arith.divf %34, %37 : vector<4x8xf32>
    %c0_17 = arith.constant 0 : index
    %c0_18 = arith.constant 0 : index
    %39 = vector.load %arg8[%c0_17, %c0_18] : memref<4x8xf32, #tpu.memory_space<vmem>>, vector<4x8xf32>
    tpu.vector_store %arg8[%c0_17, %c0_18], %38 {strides = array<i32>} : memref<4x8xf32, #tpu.memory_space<vmem>>, vector<4x8xf32>,
    %40 = vector.shape_cast %38 : vector<4x8xf32> to vector<4x8x1xf32>
    %41 = vector.broadcast %40 : vector<4x8x1xf32> to vector<4x8x32xf32>
    %42 = arith.mulf %41, %0 : vector<4x8x32xf32>
    %cst_19 = arith.constant dense<0.000000e+00> : vector<4x32xf32>
    %43 = vector.multi_reduction <add>, %42, %cst_19 [1] : vector<4x8x32xf32> to vector<4x32xf32>
    %c0_20 = arith.constant 0 : index
    %c0_21 = arith.constant 0 : index
    %44 = vector.load %arg7[%c0_20, %c0_21] : memref<4x32xf32, #tpu.memory_space<vmem>>, vector<4x32xf32>
    tpu.vector_store %arg7[%c0_20, %c0_21], %43 {strides = array<i32>} : memref<4x32xf32, #tpu.memory_space<vmem>>, vector<4x32xf32>,
    return
  }
  func.func @transform_0(%arg0: i32) -> (i32, i32, i32) {
    %c0_i32 = arith.constant 0 : i32
    %c0_i32_0 = arith.constant 0 : i32
    %c0_i32_1 = arith.constant 0 : i32
    return %arg0, %c0_i32, %c0_i32_0 : i32, i32, i32
  }
  func.func @transform_1(%arg0: i32) -> (i32, i32) {
    %c0_i32 = arith.constant 0 : i32
    %c0_i32_0 = arith.constant 0 : i32
    return %arg0, %c0_i32 : i32, i32
  }
  func.func @transform_2(%arg0: i32) -> (i32, i32) {
    %c0_i32 = arith.constant 0 : i32
    %c0_i32_0 = arith.constant 0 : i32
    %c0_i32_1 = arith.constant 0 : i32
    return %c0_i32, %c0_i32_0 : i32, i32
  }
  func.func @transform_3(%arg0: i32) -> (i32, i32) {
    %c0_i32 = arith.constant 0 : i32
    %c0_i32_0 = arith.constant 0 : i32
    %c0_i32_1 = arith.constant 0 : i32
    return %c0_i32, %c0_i32_0 : i32, i32
  }
  func.func @transform_4(%arg0: i32) -> (i32, i32) {
    %c0_i32 = arith.constant 0 : i32
    %c0_i32_0 = arith.constant 0 : i32
    %c0_i32_1 = arith.constant 0 : i32
    return %c0_i32, %c0_i32_0 : i32, i32
  }
  func.func @transform_5(%arg0: i32) -> i32 {
    %c0_i32 = arith.constant 0 : i32
    %c0_i32_0 = arith.constant 0 : i32
    return %c0_i32 : i32
  }
  func.func @transform_6(%arg0: i32) -> (i32, i32) {
    %c0_i32 = arith.constant 0 : i32
    %c0_i32_0 = arith.constant 0 : i32
    return %arg0, %c0_i32 : i32, i32
  }
  func.func @transform_7(%arg0: i32) -> (i32, i32) {
    %c0_i32 = arith.constant 0 : i32
    %c0_i32_0 = arith.constant 0 : i32
    return %arg0, %c0_i32 : i32, i32
  }
}

</mosaic_0001>

<llo_original>
// kernel: tpu_custom_call.1
$region0: #{tpu_custom_call.1}
  #allocation0 [shape = 'u32[]', space=smem, size = 0x4, offset = 0x4, fixed_abs, tag = 'smem constant byte address 0x4 - core index']
  #allocation1 [shape = 'u32[144,128]{1,0:T(1,128)}', space=vmem, size = 0x12000, scoped, tag = 'internal scratch']
  #allocation2 [shape = 'f32[1]{0:T(128)S(6)}', space=smem, size = 0x200, scoped, tag = 'scoped memory for tpu_custom_call.1']
  %s0 = inlined_call_operand.hbm [shape: f32[4,8,32], index: 0, kind: input, shape index: {}]
  %s1 = inlined_call_operand.hbm [shape: f32[4,8], index: 1, kind: input, shape index: {}]
  %s2 = inlined_call_operand.hbm [shape: f32[32,64], index: 2, kind: input, shape index: {}]
  %s3 = inlined_call_operand.vmem [shape: f32[1,64], index: 3, kind: input, shape index: {}]
  %s4 = inlined_call_operand.vmem [shape: f32[1,32], index: 4, kind: input, shape index: {}]
  %s5 = inlined_call_operand.<no memory space> [shape: f32[1], index: 5, kind: input, shape index: {}]
  %s6 = inlined_call_operand.hbm [shape: f32[4,32], index: 6, kind: output, shape index: {0}]
  %s7 = inlined_call_operand.hbm [shape: f32[4,8], index: 7, kind: output, shape index: {1}]
  %8 = xla_tuple %s6, %s7
  %s9 = sld [smem:[#allocation0]]
  $region54: #{tpu_custom_call.1} parent=0
    _
  %s11 = ssub.s32 1, %s9
  %s12 = scalar_select 0, %s11, %s9
  %13 = sst [smem:[#allocation2]] %s5
  $region1: #{tpu_custom_call.1} parent=0
    #allocation3 [shape = 'u8[16384]{0}', space=vmem, size = 0x4000, scoped, tag = 'input window, operand 0, single buffered']
    #allocation4 [shape = 's32[1]{0}', space=sflag, size = 0x4, scoped, tag = 'scoped memory for tpu_custom_call.1']
    #allocation5 [shape = 's32[1]{0}', space=sflag, size = 0x4, scoped, tag = 'scoped memory for tpu_custom_call.1']
    #allocation6 [shape = 'u8[2048]{0}', space=vmem, size = 0x800, scoped, tag = 'input window, operand 1, single buffered']
    #allocation7 [shape = 's32[1]{0}', space=sflag, size = 0x4, scoped, tag = 'scoped memory for tpu_custom_call.1']
    #allocation8 [shape = 'u8[16384]{0}', space=vmem, size = 0x4000, scoped, tag = 'input window, operand 2, single buffered']
    #allocation9 [shape = 'u8[2048]{0}', space=vmem, size = 0x800, scoped, tag = 'output window, operand 0, single buffered']
    #allocation10 [shape = 'u8[2048]{0}', space=vmem, size = 0x800, scoped, tag = 'output window, operand 1, single buffered']
    #allocation11 [shape = 's32[1]{0}', space=sflag, size = 0x4, scoped, tag = 'scoped memory for tpu_custom_call.1']
    %14 = vsyncpa [#allocation4], 0
    %15 = vsyncpa [#allocation7], 0
    %16 = vsyncpa [#allocation5], 0
    %17 = vsyncpa [#allocation11], 0
    // Predicated region
    $region2: #{tpu_custom_call.1} parent=1 // pred_check
      _
    $region3: #{tpu_custom_call.1} parent=1 // pred_check_branch
      %19 = sbr.rel (0) target = $region5
    $region4: #{tpu_custom_call.1} parent=1 // pred_region
      %s21 = ssub.s32 512, 512
      %22 = vsyncadd [#allocation4], %s21
      %s23 = sshll.u32 [#allocation3], 4
      %s24 = int_to_ptr.vmem [resolvable:$true] %s23
      %29 = dma.hbm_to_vmem [thread:$0]  %s0, 512, %s24, [#allocation4], 128, 128, 8
    $region5: #{tpu_custom_call.1} parent=1 // pred_fallthru
      _
    // Predicated region
    $region6: #{tpu_custom_call.1} parent=1 // pred_check
      _
    $region7: #{tpu_custom_call.1} parent=1 // pred_check_branch
      %31 = sbr.rel (0) target = $region9
    $region8: #{tpu_custom_call.1} parent=1 // pred_region
      %s33 = ssub.s32 64, 64
      %34 = vsyncadd [#allocation7], %s33
      %s36 = sshll.u32 [#allocation6], 4
      %s37 = int_to_ptr.vmem [resolvable:$true] %s36
      %39 = dma.hbm_to_vmem [thread:$0]  %s1, 64, %s37, [#allocation7]
    $region9: #{tpu_custom_call.1} parent=1 // pred_fallthru
      _
    // Predicated region
    $region10: #{tpu_custom_call.1} parent=1 // pred_check
      _
    $region11: #{tpu_custom_call.1} parent=1 // pred_check_branch
      %41 = sbr.rel (0) target = $region13
    $region12: #{tpu_custom_call.1} parent=1 // pred_region
      %s43 = ssub.s32 512, 512
      %44 = vsyncadd [#allocation7], %s43
      %s45 = sshll.u32 [#allocation8], 4
      %s46 = int_to_ptr.vmem [resolvable:$true] %s45
      %51 = dma.hbm_to_vmem [thread:$0]  %s2, 512, %s46, [#allocation7], 128, 128, 8
    $region13: #{tpu_custom_call.1} parent=1 // pred_fallthru
      _
    // Predicated region
    $region14: #{tpu_custom_call.1} parent=1 // pred_check
      _
    $region15: #{tpu_custom_call.1} parent=1 // pred_check_branch
      %53 = sbr.rel (0) target = $region17
    $region16: #{tpu_custom_call.1} parent=1 // pred_region
      _
    $region17: #{tpu_custom_call.1} parent=1 // pred_fallthru
      _
    // Predicated region
    $region18: #{tpu_custom_call.1} parent=1 // pred_check
      _
    $region19: #{tpu_custom_call.1} parent=1 // pred_check_branch
      %55 = sbr.rel (0) target = $region21
    $region20: #{tpu_custom_call.1} parent=1 // pred_region
      _
    $region21: #{tpu_custom_call.1} parent=1 // pred_fallthru
      _
    // Predicated region
    $region22: #{tpu_custom_call.1} parent=1 // pred_check
      _
    $region23: #{tpu_custom_call.1} parent=1 // pred_check_branch
      %57 = sbr.rel (0) target = $region25
    $region24: #{tpu_custom_call.1} parent=1 // pred_region
      _
    $region25: #{tpu_custom_call.1} parent=1 // pred_fallthru
      _
    // Predicated region
    $region26: #{tpu_custom_call.1} parent=1 // pred_check
      _
    $region27: #{tpu_custom_call.1} parent=1 // pred_check_branch
      %59 = sbr.rel (0) target = $region29
    $region28: #{tpu_custom_call.1} parent=1 // pred_region
      %60 = dma.done [#allocation4], 512
    $region29: #{tpu_custom_call.1} parent=1 // pred_fallthru
      _
    // Predicated region
    $region30: #{tpu_custom_call.1} parent=1 // pred_check
      _
    $region31: #{tpu_custom_call.1} parent=1 // pred_check_branch
      %62 = sbr.rel (0) target = $region33
    $region32: #{tpu_custom_call.1} parent=1 // pred_region
      %63 = dma.done [#allocation7], 64
    $region33: #{tpu_custom_call.1} parent=1 // pred_fallthru
      _
    // Predicated region
    $region34: #{tpu_custom_call.1} parent=1 // pred_check
      _
    $region35: #{tpu_custom_call.1} parent=1 // pred_check_branch
      %65 = sbr.rel (0) target = $region37
    $region36: #{tpu_custom_call.1} parent=1 // pred_region
      %66 = dma.done [#allocation7], 512
    $region37: #{tpu_custom_call.1} parent=1 // pred_fallthru
      _
    %v67 = vld [vmem:[#allocation3] sm:$0xff]
    %v68 = vld [vmem:[#allocation3 + $0x8] sm:$0xff]
    %v69 = vld [vmem:[#allocation3 + $0x10] sm:$0xff]
    %v70 = vld [vmem:[#allocation3 + $0x18] sm:$0xff]
    %v71 = vld [vmem:[#allocation8] sm:$0xff]
    %v72 = vld [vmem:[#allocation8 + $0x8] sm:$0xff]
    %v73 = vld [vmem:[#allocation8 + $0x10] sm:$0xff]
    %v74 = vld [vmem:[#allocation8 + $0x18] sm:$0xff]
    %v75 = vld [vmem:[%s3] sm:$0x1]
    %v77 = vlaneseq
    %v78 = vshrl.u32 %v77, 7
    %v79 = vsub.s32 0, %v78
    %v80 = vrot.slane %v75, %v79
    %vm82 = vcmask 261120
    %v84 = vsel %vm82, %v67, 0
    %v87 = vsel %vm82, %v68, 0
    %v90 = vsel %vm82, %v69, 0
    %v93 = vsel %vm82, %v70, 0
    %95 = vmatprep.subr.mxu0 0.0
    %96 = vmatpush1.msra.mxu0 0.0
    %97 = vmatprep.subr.mxu0 0.0
    %98 = vmatpush1.msra.mxu0 0.0
    %99 = vmatprep.subr.mxu0 0.0
    %100 = vmatpush1.msra.mxu0 0.0
    %101 = vmatprep.subr.mxu0 0.0
    %102 = vmatpush1.msra.mxu0 0.0
    %103 = vmatprep.subr.mxu0 0.0
    %104 = vmatpush1.msra.mxu0 0.0
    %105 = vmatprep.subr.mxu0 0.0
    %106 = vmatpush1.msra.mxu0 0.0
    %107 = vmatprep.subr.mxu0 0.0
    %108 = vmatpush1.msra.mxu0 0.0
    %109 = vmatprep.subr.mxu0 0.0
    %110 = vmatpush1.msra.mxu0 0.0
    %111 = vmatprep.subr.mxu0 0.0
    %112 = vmatpush1.msra.mxu0 0.0
    %113 = vmatprep.subr.mxu0 0.0
    %114 = vmatpush1.msra.mxu0 0.0
    %115 = vmatprep.subr.mxu0 0.0
    %116 = vmatpush1.msra.mxu0 0.0
    %117 = vmatprep.subr.mxu0 0.0
    %118 = vmatpush1.msra.mxu0 0.0
    %119 = vmatprep.subr.mxu0 0.0
    %120 = vmatpush1.msra.mxu0 %v74
    %121 = vmatprep.subr.mxu0 0.0
    %122 = vmatpush1.msra.mxu0 %v73
    %123 = vmatprep.subr.mxu0 0.0
    %124 = vmatpush1.msra.mxu0 %v72
    %125 = vmatprep.subr.mxu0 0.0
    %126 = vmatpush1.msra.mxu0 %v71
    %127 = vmatprep.subr.mxu0 0.0
    %128 = vmatpush2.msra.mxu0 0.0
    %129 = vmatprep.subr.mxu0 0.0
    %130 = vmatpush2.msra.mxu0 0.0
    %131 = vmatprep.subr.mxu0 0.0
    %132 = vmatpush2.msra.mxu0 0.0
    %133 = vmatprep.subr.mxu0 0.0
    %134 = vmatpush2.msra.mxu0 0.0
    %135 = vmatprep.subr.mxu0 0.0
    %136 = vmatpush2.msra.mxu0 0.0
    %137 = vmatprep.subr.mxu0 0.0
    %138 = vmatpush2.msra.mxu0 0.0
    %139 = vmatprep.subr.mxu0 0.0
    %140 = vmatpush2.msra.mxu0 0.0
    %141 = vmatprep.subr.mxu0 0.0
    %142 = vmatpush2.msra.mxu0 0.0
    %143 = vmatprep.subr.mxu0 0.0
    %144 = vmatpush2.msra.mxu0 0.0
    %145 = vmatprep.subr.mxu0 0.0
    %146 = vmatpush2.msra.mxu0 0.0
    %147 = vmatprep.subr.mxu0 0.0
    %148 = vmatpush2.msra.mxu0 0.0
    %149 = vmatprep.subr.mxu0 0.0
    %150 = vmatpush2.msra.mxu0 0.0
    %151 = vmatprep.subr.mxu0 0.0
    %152 = vmatpush2.msra.mxu0 0.0
    %153 = vmatprep.subr.mxu0 0.0
    %154 = vmatpush2.msra.mxu0 0.0
    %155 = vmatprep.subr.mxu0 0.0
    %156 = vmatpush2.msra.mxu0 0.0
    %157 = vmatprep.subr.mxu0 0.0
    %158 = vmatpush2.msra.mxu0 0.0
    %159 = vmatprep.mubr.f32.mxu0 0.0
    %160 = vmatmul.mubr.f32.gmra.mxu0 %v84
    %v161 = vpop.f32.mrf.mxu0
    %v162 = vadd.f32 %v80, %v161
    %v163 = vpop.f32.mrf.mxu0
    %164 = vmatprep.mubr.f32.mxu0 0.0
    %165 = vmatmul.mubr.f32.gmra.mxu0 %v87
    %v166 = vpop.f32.mrf.mxu0
    %v167 = vadd.f32 %v80, %v166
    %v168 = vpop.f32.mrf.mxu0
    %169 = vmatprep.mubr.f32.mxu0 0.0
    %170 = vmatmul.mubr.f32.gmra.mxu0 %v90
    %v171 = vpop.f32.mrf.mxu0
    %v172 = vadd.f32 %v80, %v171
    %v173 = vpop.f32.mrf.mxu0
    %174 = vmatprep.mubr.f32.mxu0 0.0
    %175 = vmatmul.mubr.f32.gmra.mxu0 %v93
    %v176 = vpop.f32.mrf.mxu0
    %v177 = vadd.f32 %v80, %v176
    %v178 = vpop.f32.mrf.mxu0
    %179 = vdwg.mxu0
    %v180 = vtanh.pop %v162
    %v181 = vtanh.pop %v167
    %v182 = vtanh.pop %v172
    %v183 = vtanh.pop %v177
    %v184 = vxor.u32 %v162, 2147483648
    %v185 = vxor.u32 %v167, 2147483648
    %v186 = vxor.u32 %v172, 2147483648
    %v187 = vxor.u32 %v177, 2147483648
    %v188 = vmul.f32 %v184, 1.442695
    %v189 = vpow.pop %v188
    %v190 = vmul.f32 %v185, 1.442695
    %v191 = vpow.pop %v190
    %v192 = vmul.f32 %v186, 1.442695
    %v193 = vpow.pop %v192
    %v194 = vmul.f32 %v187, 1.442695
    %v195 = vpow.pop %v194
    %v196 = vadd.f32 %v189, 1.0
    %v197 = vadd.f32 %v191, 1.0
    %v198 = vadd.f32 %v193, 1.0
    %v199 = vadd.f32 %v195, 1.0
    %v200 = vrcp.pop %v196
    %v201 = vmul.f32 1.0, %v200
    %v202 = vrcp.pop %v197
    %v203 = vmul.f32 1.0, %v202
    %v204 = vrcp.pop %v198
    %v205 = vmul.f32 1.0, %v204
    %v206 = vrcp.pop %v199
    %v207 = vmul.f32 1.0, %v206
    %212 = vrot.lane.b32.xlu0 %v201, 96
    %v213 = vpop.permute.xlu0 %212
    %214 = vrot.lane.b32.xlu0 %v203, 96
    %v215 = vpop.permute.xlu0 %214
    %216 = vrot.lane.b32.xlu0 %v205, 96
    %v217 = vpop.permute.xlu0 %216
    %218 = vrot.lane.b32.xlu0 %v207, 96
    %v219 = vpop.permute.xlu0 %218
    %v224 = vmul.f32 %v180, %v213
    %v225 = vmul.f32 %v181, %v215
    %v226 = vmul.f32 %v182, %v217
    %v227 = vmul.f32 %v183, %v219
    %v228 = vld [vmem:[%s4] sm:$0x1]
    %v230 = vlaneseq
    %v231 = vshrl.u32 %v230, 7
    %v232 = vsub.s32 0, %v231
    %v233 = vrot.slane %v228, %v232
    %v235 = vmul.f32 %v224, %v233
    %v236 = vmul.f32 %v225, %v233
    %v237 = vmul.f32 %v226, %v233
    %v238 = vmul.f32 %v227, %v233
    %v239 = vsel %vm82, %v235, 0.0
    %240 = vadd.xlane.f32.xlu0 %v239
    %v241 = vpop.xlane.xlu0 %240
    %v242 = vsel %vm82, %v236, 0.0
    %243 = vadd.xlane.f32.xlu0 %v242
    %v244 = vpop.xlane.xlu0 %243
    %v245 = vsel %vm82, %v237, 0.0
    %246 = vadd.xlane.f32.xlu0 %v245
    %v247 = vpop.xlane.xlu0 %246
    %v248 = vsel %vm82, %v238, 0.0
    %249 = vadd.xlane.f32.xlu0 %v248
    %v250 = vpop.xlane.xlu0 %249
    %s251 = sld [smem:[#allocation2]]
    %v252 = vstv %s251
    %v253 = vadd.f32 %v241, %v252
    %v254 = vadd.f32 %v244, %v252
    %v255 = vadd.f32 %v247, %v252
    %v256 = vadd.f32 %v250, %v252
    %v257 = vld [vmem:[#allocation6] sm:$0xf]
    %vm258 = vcmp.gt.f32.partialorder %v257, 0.5
    %v263 = vlaneseq
    %v264 = vand.u32 %v263, 127
    %v265 = vlaneseq
    %v266 = vshrl.u32 %v265, 7
    %v267 = vsub.s32 %v264, %v266
    %v268 = vrot.slane %v253, %v267
    %v269 = vlaneseq
    %v270 = vshrl.u32 %v269, 7
    %v271 = vsub.s32 %v264, %v270
    %v272 = vrot.slane %v254, %v271
    %v273 = vlaneseq
    %v274 = vshrl.u32 %v273, 7
    %v275 = vsub.s32 %v264, %v274
    %v276 = vrot.slane %v255, %v275
    %v277 = vlaneseq
    %v278 = vshrl.u32 %v277, 7
    %v279 = vsub.s32 %v264, %v278
    %v280 = vrot.slane %v256, %v279
    %vm281 = vcmask 1041409
    %v282 = vsel %vm281, %v272, %v268
    %vm283 = vcmask 1042434
    %v284 = vsel %vm283, %v276, %v282
    %vm285 = vcmask 1043459
    %v286 = vsel %vm285, %v280, %v284
    %v288 = vsel %vm258, -inf, %v286
    %vm289 = vcmask 60416
    %v290 = vsel %vm289, %v288, -inf
    %291 = vmax.xlane.f32.xlu0 %v290
    %v292 = vpop.xlane.xlu0 %291
    %v293 = vsub.f32 %v288, %v292
    %v294 = vmul.f32 %v293, 1.442695
    %v295 = vpow.pop %v294
    %v296 = vsel %vm289, %v295, 0.0
    %297 = vadd.xlane.f32.xlu0 %v296
    %v298 = vpop.xlane.xlu0 %297
    %v299 = vrcp.pop %v298
    %v300 = vmul.f32 %v295, %v299
    %301 = vst.msk [vmem:[#allocation10] sm:$0xf] %vm289, %v300
    %v302 = vlaneseq
    %v303 = vshrl.u32 %v302, 7
    %v304 = vsub.s32 0, %v303
    %v305 = vrot.slane %v300, %v304
    %307 = vbcast.lane.b32.xlu0 %v305, 256
    %v308 = vpop.permute.xlu0 %307
    %v309 = vlaneseq
    %v310 = vshrl.u32 %v309, 7
    %v311 = vsub.s32 1, %v310
    %v312 = vrot.slane %v300, %v311
    %314 = vbcast.lane.b32.xlu0 %v312, 256
    %v315 = vpop.permute.xlu0 %314
    %v316 = vlaneseq
    %v317 = vshrl.u32 %v316, 7
    %v318 = vsub.s32 2, %v317
    %v319 = vrot.slane %v300, %v318
    %321 = vbcast.lane.b32.xlu0 %v319, 256
    %v322 = vpop.permute.xlu0 %321
    %v323 = vlaneseq
    %v324 = vshrl.u32 %v323, 7
    %v325 = vsub.s32 3, %v324
    %v326 = vrot.slane %v300, %v325
    %328 = vbcast.lane.b32.xlu0 %v326, 256
    %v329 = vpop.permute.xlu0 %328
    %v330 = vmul.f32 %v308, %v67
    %v331 = vmul.f32 %v315, %v68
    %v332 = vmul.f32 %v322, %v69
    %v333 = vmul.f32 %v329, %v70
    %v334 = vsel %vm82, %v330, 0.0
    %v335 = vrot.slane %v334, 4
    %v336 = vadd.f32 %v334, %v335
    %v337 = vrot.slane %v336, 2
    %v338 = vadd.f32 %v336, %v337
    %v339 = vrot.slane %v338, 1
    %v340 = vadd.f32 %v338, %v339
    %v341 = vsel %vm82, %v331, 0.0
    %v342 = vrot.slane %v341, 4
    %v343 = vadd.f32 %v341, %v342
    %v344 = vrot.slane %v343, 2
    %v345 = vadd.f32 %v343, %v344
    %v346 = vrot.slane %v345, 1
    %v347 = vadd.f32 %v345, %v346
    %v348 = vsel %vm82, %v332, 0.0
    %v349 = vrot.slane %v348, 4
    %v350 = vadd.f32 %v348, %v349
    %v351 = vrot.slane %v350, 2
    %v352 = vadd.f32 %v350, %v351
    %v353 = vrot.slane %v352, 1
    %v354 = vadd.f32 %v352, %v353
    %v355 = vsel %vm82, %v333, 0.0
    %v356 = vrot.slane %v355, 4
    %v357 = vadd.f32 %v355, %v356
    %v358 = vrot.slane %v357, 2
    %v359 = vadd.f32 %v357, %v358
    %v360 = vrot.slane %v359, 1
    %v361 = vadd.f32 %v359, %v360
    %v366 = vsel %vm281, %v347, %v340
    %v367 = vsel %vm283, %v354, %v366
    %v368 = vsel %vm285, %v361, %v367
    %vm370 = vcmask 257024
    %371 = vst.msk [vmem:[#allocation9] sm:$0xf] %vm370, %v368
    // Predicated region
    $region38: #{tpu_custom_call.1} parent=1 // pred_check
      _
    $region39: #{tpu_custom_call.1} parent=1 // pred_check_branch
      %373 = sbr.rel (0) target = $region41
    $region40: #{tpu_custom_call.1} parent=1 // pred_region
      %s375 = ssub.s32 64, 64
      %376 = vsyncadd [#allocation5], %s375
      %s378 = sshll.u32 [#allocation9], 4
      %s379 = int_to_ptr.vmem [resolvable:$true] %s378
      %381 = dma.vmem_to_hbm [thread:$0]  %s379, 64, %s6, [#allocation5]
    $region41: #{tpu_custom_call.1} parent=1 // pred_fallthru
      _
    // Predicated region
    $region42: #{tpu_custom_call.1} parent=1 // pred_check
      _
    $region43: #{tpu_custom_call.1} parent=1 // pred_check_branch
      %383 = sbr.rel (0) target = $region45
    $region44: #{tpu_custom_call.1} parent=1 // pred_region
      %s385 = ssub.s32 64, 64
      %386 = vsyncadd [#allocation11], %s385
      %s388 = sshll.u32 [#allocation10], 4
      %s389 = int_to_ptr.vmem [resolvable:$true] %s388
      %391 = dma.vmem_to_hbm [thread:$0]  %s389, 64, %s7, [#allocation11]
    $region45: #{tpu_custom_call.1} parent=1 // pred_fallthru
      _
    // Predicated region
    $region46: #{tpu_custom_call.1} parent=1 // pred_check
      _
    $region47: #{tpu_custom_call.1} parent=1 // pred_check_branch
      %393 = sbr.rel (0) target = $region49
    $region48: #{tpu_custom_call.1} parent=1 // pred_region
      %394 = dma.done [#allocation5], 64
    $region49: #{tpu_custom_call.1} parent=1 // pred_fallthru
      _
    // Predicated region
    $region50: #{tpu_custom_call.1} parent=1 // pred_check
      _
    $region51: #{tpu_custom_call.1} parent=1 // pred_check_branch
      %396 = sbr.rel (0) target = $region53
    $region52: #{tpu_custom_call.1} parent=1 // pred_region
      %397 = dma.done [#allocation11], 64
    $region53: #{tpu_custom_call.1} parent=1 // pred_fallthru
      _
    %398 = vsyncpa [#allocation4], 1
    %399 = vsyncpa [#allocation7], 1
    %400 = vsyncpa [#allocation5], 1
    %401 = vsyncpa [#allocation11], 1

</llo_original>
